<compile_context>
chip_gen: v6e
topology: v6e:2x2x1
jax: 0.10.0
libtpu: 0.0.40
codegen_flags: <defaults>
</compile_context>

<pallas_src>
import functools

import jax
import jax.numpy as jnp
from jax.experimental import pallas as pl
from jax.experimental.pallas import tpu as pltpu

# Polynomial ReLU-approximation coefficients (from the PyTorch module).
A = 0.1524
B = 0.5
C = 0.409

SUBLANE = 8  # f32 sublane unit; bf16 packs 16 rows/vreg -> keep tiles %16 when possible


def _round_up(n, m):
    return ((n + m - 1) // m) * m


def two_layer_kernel(x_ref, w1_ref, b1_ref, w2_ref, b2_ref, o_ref):
    # linear1: (tile_n, D_in) @ (D_in, H) on the MXU, f32 accumulate.
    h = jnp.dot(x_ref[...], w1_ref[...], preferred_element_type=jnp.float32)
    h = h + b1_ref[...]                       # (tile_n, H) + (1, H), f32

    # ReLUApproxim forward: a*x^2 + b*x + c, Horner form (one fewer vmul), kept in f32.
    act = h * (A * h + B) + C

    # linear2: (tile_n, H) @ (H, D_out) on the MXU, f32 accumulate.
    y = jnp.dot(act.astype(w2_ref.dtype), w2_ref[...],
                preferred_element_type=jnp.float32)
    o_ref[...] = (y + b2_ref[...]).astype(o_ref.dtype)


@functools.partial(jax.jit, static_argnames=("tile_n",))
def two_layer_net(x, w1, b1, w2, b2, *, tile_n=4096):
    """Forward pass of TwoLayerNet.

    x: (N, D_in)   w1: (H, D_in)   b1: (H,)   w2: (D_out, H)   b2: (D_out,)
    Returns (N, D_out) float32.
    """
    N, D_in = x.shape
    H = w1.shape[0]
    D_out = w2.shape[0]

    # bf16 matmul operands (native MXU rate, half the x HBM stream); f32 biases/output.
    x_lp = x.astype(jnp.bfloat16)
    w1t = w1.T.astype(jnp.bfloat16)             # (D_in, H)  -- one-time tiny transpose
    w2t = w2.T.astype(jnp.bfloat16)             # (H, D_out)
    b1r = b1.astype(jnp.float32).reshape(1, H)
    b2r = b2.astype(jnp.float32).reshape(1, D_out)

    # Tile the batch: multiple of 16 (bf16 sublane packing), capped by a ~8 MiB
    # pipeline-buffer budget (safe inside v5e's 16 MiB scoped default), clamped to the
    # (sublane-rounded) batch so tiny batches get a single full-extent block.
    # A partial last tile is handled by Pallas (masked stores) -> N is never padded.
    per_row_bytes = 2 * (D_in * 2 + D_out * 4) + 3 * H * 4   # dbl-buffered io + f32 temps
    tile_cap = max(SUBLANE, (8 << 20) // per_row_bytes)
    tile_n = max(SUBLANE, min(tile_n, tile_cap))
    if tile_n >= 16:
        tile_n = (tile_n // 16) * 16
    tile_n = min(tile_n, _round_up(N, SUBLANE))

    grid = (pl.cdiv(N, tile_n),)

    # VMEM budget: Pallas double-buffers every input/output block (weights included).
    vmem_bytes = (
        2 * tile_n * D_in * 2              # x tiles (bf16), double-buffered
        + 2 * tile_n * D_out * 4           # out tiles (f32), double-buffered
        + 2 * (D_in * H + H * D_out) * 2   # bf16 weights, double-buffered
        + 2 * (H + D_out) * 4              # f32 biases, double-buffered
        + 3 * tile_n * H * 4               # in-kernel f32 intermediates
        + (4 << 20)                        # compiler scratch headroom
    )
    vmem_limit = int(min(max(vmem_bytes, 16 << 20), 32 << 20))

    cost = pl.CostEstimate(
        flops=2 * N * (D_in * H + H * D_out) + 3 * N * H,
        transcendentals=0,
        bytes_accessed=(N * D_in * 2 + N * D_out * 4
                        + (D_in * H + H * D_out) * 2 + (H + D_out) * 4),
    )

    return pl.pallas_call(
        two_layer_kernel,
        out_shape=jax.ShapeDtypeStruct((N, D_out), jnp.float32),
        grid=grid,
        in_specs=[
            # Batch tile marches along the grid; full-extent feature dims (no padding).
            pl.BlockSpec((tile_n, D_in), lambda i: (i, 0)),
            # Weights / biases: constant index_map -> fetched once, VMEM-resident.
            pl.BlockSpec((D_in, H), lambda i: (0, 0)),
            pl.BlockSpec((1, H), lambda i: (0, 0)),
            pl.BlockSpec((H, D_out), lambda i: (0, 0)),
            pl.BlockSpec((1, D_out), lambda i: (0, 0)),
        ],
        out_specs=pl.BlockSpec((tile_n, D_out), lambda i: (i, 0)),
        compiler_params=pltpu.CompilerParams(
            dimension_semantics=("parallel",),   # splits batch across TCs on v7x
            vmem_limit_bytes=vmem_limit,
        ),
        cost_estimate=cost,
    )(x_lp, w1t, b1r, w2t, b2r)


def reference(x, w1, b1, w2, b2):
    h = x @ w1.T + b1
    h_act = A * h * h + B * h + C
    return h_act @ w2.T + b2


if __name__ == "__main__":
    # Small shapes consistent with the module's forward: batch=8, D_in=32, H=32, D_out=16.
    N, D_in, H, D_out = 8, 32, 32, 16

    key = jax.random.PRNGKey(0)
    k1, k2, k3, k4, kx = jax.random.split(key, 5)

    # Deterministic init mimicking torch.nn.Linear: U(-1/sqrt(fan_in), 1/sqrt(fan_in)).
    bound1 = 1.0 / (D_in ** 0.5)
    bound2 = 1.0 / (H ** 0.5)
    w1 = jax.random.uniform(k1, (H, D_in), jnp.float32, -bound1, bound1)
    b1 = jax.random.uniform(k2, (H,), jnp.float32, -bound1, bound1)
    w2 = jax.random.uniform(k3, (D_out, H), jnp.float32, -bound2, bound2)
    b2 = jax.random.uniform(k4, (D_out,), jnp.float32, -bound2, bound2)

    x = jax.random.normal(kx, (N, D_in), jnp.float32)

    y = jax.block_until_ready(two_layer_net(x, w1, b1, w2, b2))

    y_ref = reference(x, w1, b1, w2, b2)
    assert y.shape == (N, D_out)
    # bf16 matmul operands -> compare against the f32 reference with a loose tolerance.
    max_err = float(jnp.max(jnp.abs(y - y_ref)))
    assert jnp.allclose(y, y_ref, atol=3e-2, rtol=3e-2), max_err

    print("KERNEL_OK")
</pallas_src>

<mosaic_0001>
module attributes {stable_mosaic.version = 11 : i64} {
  func.func @two_layer_kernel(%arg0: i32, %arg1: memref<8x32xbf16, #tpu.memory_space<vmem>>, %arg2: memref<32x32xbf16, #tpu.memory_space<vmem>>, %arg3: memref<1x32xf32, #tpu.memory_space<vmem>>, %arg4: memref<32x16xbf16, #tpu.memory_space<vmem>>, %arg5: memref<1x16xf32, #tpu.memory_space<vmem>>, %arg6: memref<8x16xf32, #tpu.memory_space<vmem>>) attributes {dimension_semantics = [#tpu.dimension_semantics<parallel>], iteration_bounds = array<i64: 1>, scalar_prefetch = 0 : i64, scratch_operands = 0 : i64, tpu.core_type = #tpu.core_type<tc>, window_params = [{transform_indices = @transform_0, window_bounds = array<i64: 8, 32>}, {pipeline_mode = #tpu.pipeline_mode<synchronous>, transform_indices = @transform_1, window_bounds = array<i64: 32, 32>}, {pipeline_mode = #tpu.pipeline_mode<synchronous>, transform_indices = @transform_2, window_bounds = array<i64: 1, 32>}, {pipeline_mode = #tpu.pipeline_mode<synchronous>, transform_indices = @transform_3, window_bounds = array<i64: 32, 16>}, {pipeline_mode = #tpu.pipeline_mode<synchronous>, transform_indices = @transform_4, window_bounds = array<i64: 1, 16>}, {transform_indices = @transform_5, window_bounds = array<i64: 8, 16>}]} {
    %c0 = arith.constant 0 : index
    %c0_0 = arith.constant 0 : index
    %0 = vector.load %arg1[%c0, %c0_0] : memref<8x32xbf16, #tpu.memory_space<vmem>>, vector<8x32xbf16>
    %c0_1 = arith.constant 0 : index
    %c0_2 = arith.constant 0 : index
    %1 = vector.load %arg2[%c0_1, %c0_2] : memref<32x32xbf16, #tpu.memory_space<vmem>>, vector<32x32xbf16>
    %cst = arith.constant dense<0.000000e+00> : vector<8x32xf32>
    %2 = tpu.matmul %0, %1, %cst {dimension_numbers = #tpu.dot_dimension_numbers<[1], [0], [0], [1], [0, 0, 1, 1], [], []>} : vector<8x32xbf16>, vector<32x32xbf16>, vector<8x32xf32> -> vector<8x32xf32>
    %c0_3 = arith.constant 0 : index
    %c0_4 = arith.constant 0 : index
    %3 = vector.load %arg3[%c0_3, %c0_4] : memref<1x32xf32, #tpu.memory_space<vmem>>, vector<1x32xf32>
    %4 = vector.broadcast %3 : vector<1x32xf32> to vector<8x32xf32>
    %5 = arith.addf %2, %4 : vector<8x32xf32>
    %cst_5 = arith.constant 1.524000e-01 : f32
    %6 = vector.broadcast %cst_5 : f32 to vector<8x32xf32>
    %7 = arith.mulf %6, %5 : vector<8x32xf32>
    %cst_6 = arith.constant 5.000000e-01 : f32
    %8 = vector.broadcast %cst_6 : f32 to vector<8x32xf32>
    %9 = arith.addf %7, %8 : vector<8x32xf32>
    %10 = arith.mulf %5, %9 : vector<8x32xf32>
    %cst_7 = arith.constant 4.090000e-01 : f32
    %11 = vector.broadcast %cst_7 : f32 to vector<8x32xf32>
    %12 = arith.addf %10, %11 : vector<8x32xf32>
    %13 = arith.truncf %12 : vector<8x32xf32> to vector<8x32xbf16>
    %c0_8 = arith.constant 0 : index
    %c0_9 = arith.constant 0 : index
    %14 = vector.load %arg4[%c0_8, %c0_9] : memref<32x16xbf16, #tpu.memory_space<vmem>>, vector<32x16xbf16>
    %cst_10 = arith.constant dense<0.000000e+00> : vector<8x16xf32>
    %15 = tpu.matmul %13, %14, %cst_10 {dimension_numbers = #tpu.dot_dimension_numbers<[1], [0], [0], [1], [0, 0, 1, 1], [], []>} : vector<8x32xbf16>, vector<32x16xbf16>, vector<8x16xf32> -> vector<8x16xf32>
    %c0_11 = arith.constant 0 : index
    %c0_12 = arith.constant 0 : index
    %16 = vector.load %arg5[%c0_11, %c0_12] : memref<1x16xf32, #tpu.memory_space<vmem>>, vector<1x16xf32>
    %17 = vector.broadcast %16 : vector<1x16xf32> to vector<8x16xf32>
    %18 = arith.addf %15, %17 : vector<8x16xf32>
    %c0_13 = arith.constant 0 : index
    %c0_14 = arith.constant 0 : index
    %19 = vector.load %arg6[%c0_13, %c0_14] : memref<8x16xf32, #tpu.memory_space<vmem>>, vector<8x16xf32>
    tpu.vector_store %arg6[%c0_13, %c0_14], %18 {strides = array<i32>} : memref<8x16xf32, #tpu.memory_space<vmem>>, vector<8x16xf32>,
    return
  }
  func.func @transform_0(%arg0: i32) -> (i32, i32) {
    %c0_i32 = arith.constant 0 : i32
    %c0_i32_0 = arith.constant 0 : i32
    return %arg0, %c0_i32 : i32, i32
  }
  func.func @transform_1(%arg0: i32) -> (i32, i32) {
    %c0_i32 = arith.constant 0 : i32
    %c0_i32_0 = arith.constant 0 : i32
    %c0_i32_1 = arith.constant 0 : i32
    return %c0_i32, %c0_i32_0 : i32, i32
  }
  func.func @transform_2(%arg0: i32) -> (i32, i32) {
    %c0_i32 = arith.constant 0 : i32
    %c0_i32_0 = arith.constant 0 : i32
    %c0_i32_1 = arith.constant 0 : i32
    return %c0_i32, %c0_i32_0 : i32, i32
  }
  func.func @transform_3(%arg0: i32) -> (i32, i32) {
    %c0_i32 = arith.constant 0 : i32
    %c0_i32_0 = arith.constant 0 : i32
    %c0_i32_1 = arith.constant 0 : i32
    return %c0_i32, %c0_i32_0 : i32, i32
  }
  func.func @transform_4(%arg0: i32) -> (i32, i32) {
    %c0_i32 = arith.constant 0 : i32
    %c0_i32_0 = arith.constant 0 : i32
    %c0_i32_1 = arith.constant 0 : i32
    return %c0_i32, %c0_i32_0 : i32, i32
  }
  func.func @transform_5(%arg0: i32) -> (i32, i32) {
    %c0_i32 = arith.constant 0 : i32
    %c0_i32_0 = arith.constant 0 : i32
    return %arg0, %c0_i32 : i32, i32
  }
}

</mosaic_0001>

<llo_original>
// kernel: two_layer_net.1
$region0: #{two_layer_net.1}
  #allocation0 [shape = 'u32[]', space=smem, size = 0x4, offset = 0x4, fixed_abs, tag = 'smem constant byte address 0x4 - core index']
  #allocation1 [shape = 'u32[144,128]{1,0:T(1,128)}', space=vmem, size = 0x12000, scoped, tag = 'internal scratch']
  %s0 = inlined_call_operand.vmem [shape: bf16[8,32], index: 0, kind: input, shape index: {}]
  %s1 = inlined_call_operand.vmem [shape: bf16[32,32], index: 1, kind: input, shape index: {}]
  %s2 = inlined_call_operand.vmem [shape: f32[1,32], index: 2, kind: input, shape index: {}]
  %s3 = inlined_call_operand.vmem [shape: bf16[32,16], index: 3, kind: input, shape index: {}]
  %s4 = inlined_call_operand.vmem [shape: f32[1,16], index: 4, kind: input, shape index: {}]
  %s5 = inlined_call_operand.hbm [shape: f32[8,16], index: 5, kind: output, shape index: {}]
  %s6 = sld [smem:[#allocation0]]
  $region30: #{two_layer_net.1} parent=0
    _
  %s8 = ssub.s32 1, %s6
  %s9 = scalar_select 0, %s8, %s6
  $region1: #{two_layer_net.1} parent=0
    #allocation2 [shape = 'u8[4096]{0}', space=vmem, size = 0x1000, scoped, tag = 'output window, operand 0, single buffered']
    #allocation3 [shape = 's32[1]{0}', space=sflag, size = 0x4, scoped, tag = 'scoped memory for two_layer_net.1']
    %10 = vsyncpa [#allocation3], 0
    // Predicated region
    $region2: #{two_layer_net.1} parent=1 // pred_check
      _
    $region3: #{two_layer_net.1} parent=1 // pred_check_branch
      %12 = sbr.rel (0) target = $region5
    $region4: #{two_layer_net.1} parent=1 // pred_region
      _
    $region5: #{two_layer_net.1} parent=1 // pred_fallthru
      _
    // Predicated region
    $region6: #{two_layer_net.1} parent=1 // pred_check
      _
    $region7: #{two_layer_net.1} parent=1 // pred_check_branch
      %14 = sbr.rel (0) target = $region9
    $region8: #{two_layer_net.1} parent=1 // pred_region
      _
    $region9: #{two_layer_net.1} parent=1 // pred_fallthru
      _
    // Predicated region
    $region10: #{two_layer_net.1} parent=1 // pred_check
      _
    $region11: #{two_layer_net.1} parent=1 // pred_check_branch
      %16 = sbr.rel (0) target = $region13
    $region12: #{two_layer_net.1} parent=1 // pred_region
      _
    $region13: #{two_layer_net.1} parent=1 // pred_fallthru
      _
    // Predicated region
    $region14: #{two_layer_net.1} parent=1 // pred_check
      _
    $region15: #{two_layer_net.1} parent=1 // pred_check_branch
      %18 = sbr.rel (0) target = $region17
    $region16: #{two_layer_net.1} parent=1 // pred_region
      _
    $region17: #{two_layer_net.1} parent=1 // pred_fallthru
      _
    // Predicated region
    $region18: #{two_layer_net.1} parent=1 // pred_check
      _
    $region19: #{two_layer_net.1} parent=1 // pred_check_branch
      %20 = sbr.rel (0) target = $region21
    $region20: #{two_layer_net.1} parent=1 // pred_region
      _
    $region21: #{two_layer_net.1} parent=1 // pred_fallthru
      _
    %v22 = vld [vmem:[%s0] sm:$0xf]
    %v23 = vld [vmem:[%s1] sm:$0xf]
    %v24 = vld [vmem:[%s1 + $0x4] sm:$0xf]
    %v25 = vld [vmem:[%s1 + $0x8] sm:$0xf]
    %v26 = vld [vmem:[%s1 + $0xc] sm:$0xf]
    %v27 = vld [vmem:[%s2] sm:$0x1]
    %v29 = vlaneseq
    %v30 = vshrl.u32 %v29, 7
    %v31 = vsub.s32 0, %v30
    %v32 = vrot.slane %v27, %v31
    %v38 = vunpack.c.l.b16 %v23
    %v39 = vunpack.c.l.b16 %v24
    %v40 = vunpack.c.l.b16 %v25
    %v41 = vunpack.c.l.b16 %v26
    %v42 = vpack.c.b16 %v39, %v38
    %v43 = vpack.c.b16 %v41, %v40
    %vm46 = vcmask 261120
    %v48 = vsel %vm46, %v22, 0
    %50 = vmatprep.subr.bf16.mxu0 0
    %51 = vmatpush1.bf16.msra.mxu0 0
    %52 = vmatprep.subr.bf16.mxu0 0
    %53 = vmatpush1.bf16.msra.mxu0 0
    %54 = vmatprep.subr.bf16.mxu0 0
    %55 = vmatpush1.bf16.msra.mxu0 0
    %56 = vmatprep.subr.bf16.mxu0 0
    %57 = vmatpush1.bf16.msra.mxu0 0
    %58 = vmatprep.subr.bf16.mxu0 0
    %59 = vmatpush1.bf16.msra.mxu0 0
    %60 = vmatprep.subr.bf16.mxu0 0
    %61 = vmatpush1.bf16.msra.mxu0 0
    %62 = vmatprep.subr.bf16.mxu0 0
    %63 = vmatpush1.bf16.msra.mxu0 %v43
    %64 = vmatprep.subr.bf16.mxu0 0
    %65 = vmatpush1.bf16.msra.mxu0 %v42
    %66 = vmatprep.subr.bf16.mxu0 0
    %67 = vmatpush2.bf16.msra.mxu0 0
    %68 = vmatprep.subr.bf16.mxu0 0
    %69 = vmatpush2.bf16.msra.mxu0 0
    %70 = vmatprep.subr.bf16.mxu0 0
    %71 = vmatpush2.bf16.msra.mxu0 0
    %72 = vmatprep.subr.bf16.mxu0 0
    %73 = vmatpush2.bf16.msra.mxu0 0
    %74 = vmatprep.subr.bf16.mxu0 0
    %75 = vmatpush2.bf16.msra.mxu0 0
    %76 = vmatprep.subr.bf16.mxu0 0
    %77 = vmatpush2.bf16.msra.mxu0 0
    %78 = vmatprep.subr.bf16.mxu0 0
    %79 = vmatpush2.bf16.msra.mxu0 0
    %80 = vmatprep.subr.bf16.mxu0 0
    %81 = vmatpush2.bf16.msra.mxu0 0
    %82 = vmatprep.mubr.bf16.mxu0 0
    %83 = vmatmul.mubr.bf16.gmra.mxu0 %v48
    %v84 = vpop.f32.mrf.mxu0
    %v85 = vadd.f32 %v32, %v84
    %v86 = vpop.f32.mrf.mxu0
    %v87 = vpop.f32.mrf.mxu0
    %v88 = vpop.f32.mrf.mxu0
    %89 = vdwg.mxu0
    %v90 = vmul.f32 %v85, 0.1524
    %v91 = vadd.f32 %v90, 0.5
    %v92 = vmul.f32 %v85, %v91
    %v93 = vadd.f32 %v92, 0.409
    %v94 = vpack.c.bf16 %v93, %v93
    %v95 = vld [vmem:[%s3] sm:$0xf]
    %v96 = vld [vmem:[%s3 + $0x4] sm:$0xf]
    %v97 = vld [vmem:[%s3 + $0x8] sm:$0xf]
    %v98 = vld [vmem:[%s3 + $0xc] sm:$0xf]
    %v99 = vld [vmem:[%s4] sm:$0x1]
    %v101 = vlaneseq
    %v102 = vshrl.u32 %v101, 7
    %v103 = vsub.s32 0, %v102
    %v104 = vrot.slane %v99, %v103
    %v110 = vunpack.c.l.b16 %v95
    %v111 = vunpack.c.l.b16 %v96
    %v112 = vunpack.c.l.b16 %v97
    %v113 = vunpack.c.l.b16 %v98
    %v114 = vpack.c.b16 %v111, %v110
    %v115 = vpack.c.b16 %v113, %v112
    %v119 = vsel %vm46, %v94, 0
    %121 = vmatprep.subr.bf16.mxu0 0
    %122 = vmatpush1.bf16.msra.mxu0 0
    %123 = vmatprep.subr.bf16.mxu0 0
    %124 = vmatpush1.bf16.msra.mxu0 0
    %125 = vmatprep.subr.bf16.mxu0 0
    %126 = vmatpush1.bf16.msra.mxu0 0
    %127 = vmatprep.subr.bf16.mxu0 0
    %128 = vmatpush1.bf16.msra.mxu0 0
    %129 = vmatprep.subr.bf16.mxu0 0
    %130 = vmatpush1.bf16.msra.mxu0 0
    %131 = vmatprep.subr.bf16.mxu0 0
    %132 = vmatpush1.bf16.msra.mxu0 0
    %133 = vmatprep.subr.bf16.mxu0 0
    %134 = vmatpush1.bf16.msra.mxu0 %v115
    %135 = vmatprep.subr.bf16.mxu0 0
    %136 = vmatpush1.bf16.msra.mxu0 %v114
    %137 = vmatprep.subr.bf16.mxu0 0
    %138 = vmatpush2.bf16.msra.mxu0 0
    %139 = vmatprep.subr.bf16.mxu0 0
    %140 = vmatpush2.bf16.msra.mxu0 0
    %141 = vmatprep.subr.bf16.mxu0 0
    %142 = vmatpush2.bf16.msra.mxu0 0
    %143 = vmatprep.subr.bf16.mxu0 0
    %144 = vmatpush2.bf16.msra.mxu0 0
    %145 = vmatprep.subr.bf16.mxu0 0
    %146 = vmatpush2.bf16.msra.mxu0 0
    %147 = vmatprep.subr.bf16.mxu0 0
    %148 = vmatpush2.bf16.msra.mxu0 0
    %149 = vmatprep.subr.bf16.mxu0 0
    %150 = vmatpush2.bf16.msra.mxu0 0
    %151 = vmatprep.subr.bf16.mxu0 0
    %152 = vmatpush2.bf16.msra.mxu0 0
    %153 = vmatprep.mubr.bf16.mxu0 0
    %154 = vmatmul.mubr.bf16.gmra.mxu0 %v119
    %v155 = vpop.f32.mrf.mxu0
    %v156 = vadd.f32 %v104, %v155
    %v157 = vpop.f32.mrf.mxu0
    %v158 = vpop.f32.mrf.mxu0
    %v159 = vpop.f32.mrf.mxu0
    %160 = vdwg.mxu0
    %vm161 = vcmask 130048
    %162 = vst.msk [vmem:[#allocation2] sm:$0xff] %vm161, %v156
    // Predicated region
    $region22: #{two_layer_net.1} parent=1 // pred_check
      _
    $region23: #{two_layer_net.1} parent=1 // pred_check_branch
      %164 = sbr.rel (0) target = $region25
    $region24: #{two_layer_net.1} parent=1 // pred_region
      %s166 = ssub.s32 128, 128
      %167 = vsyncadd [#allocation3], %s166
      %s169 = sshll.u32 [#allocation2], 4
      %s170 = int_to_ptr.vmem [resolvable:$true] %s169
      %172 = dma.vmem_to_hbm [thread:$0]  %s170, 128, %s5, [#allocation3]
    $region25: #{two_layer_net.1} parent=1 // pred_fallthru
      _
    // Predicated region
    $region26: #{two_layer_net.1} parent=1 // pred_check
      _
    $region27: #{two_layer_net.1} parent=1 // pred_check_branch
      %174 = sbr.rel (0) target = $region29
    $region28: #{two_layer_net.1} parent=1 // pred_region
      %175 = dma.done [#allocation3], 128
    $region29: #{two_layer_net.1} parent=1 // pred_fallthru
      _
    %176 = vsyncpa [#allocation3], 1

</llo_original>
